<compile_context>
chip_gen: v7x
topology: tpu7x:2x2x1
jax: 0.10.0
libtpu: 0.0.40
codegen_flags: <defaults>
</compile_context>

<pallas_src>
import functools

import jax
import jax.numpy as jnp
from jax.experimental import pallas as pl
from jax.experimental.pallas import tpu as pltpu

_PC = 8  # P-chunk height (sublanes) for the one-hot accumulation


def _compositor_kernel(zbuf_ref, frag_ref, pt_ref, out_ref,
                       wb_ref, fb_ref, a_ref, *, scale):
    # zbuf_ref / frag_ref : (K, T)      pixel-lane-dense input blocks
    # pt_ref              : (Cpad, Ppad) resident point features
    # out_ref             : (C, T)
    # wb_ref / fb_ref     : (K, PC, T)  splatted weights / indices (scratch)
    # a_ref               : (Ppad, T)   weighted one-hot matrix (scratch)
    num_k, t = zbuf_ref.shape
    p_pad = a_ref.shape[0]

    # ---- prologue: softmax(importance * scale) over K, splatted to PC rows ----
    z = zbuf_ref[...]
    z = jnp.where(z < 0.0, jnp.float32(-0.0001), z)
    imp = (jnp.float32(1.0) / (z + jnp.float32(1e-6))) * jnp.float32(scale)
    m = jnp.max(imp, axis=0, keepdims=True)                       # (1, T)
    e = jnp.exp(imp - m)                                          # (K, T)
    denom = jnp.sum(e, axis=0, keepdims=True)                     # (1, T)
    w = e * pl.reciprocal(denom, approx=False)                    # exact softmax

    frag = frag_ref[...]                                          # (K, T) i32
    for kk in range(num_k):                                       # K sublane splats,
        wb_ref[kk] = jnp.broadcast_to(w[kk:kk + 1, :], (_PC, t))  # reused by every
        fb_ref[kk] = jnp.broadcast_to(frag[kk:kk + 1, :], (_PC, t))  # P-chunk below

    # ---- chunked one-hot x weight accumulation (K innermost, acc in vregs) ----
    def chunk_body(j, carry):
        base = pl.multiple_of(j * _PC, _PC)
        p_idx = jax.lax.broadcasted_iota(jnp.int32, (_PC, t), 0) + base
        acc = jnp.zeros((_PC, t), jnp.float32)
        for kk in range(num_k):                                   # 3 VPU ops / elem
            acc = acc + jnp.where(fb_ref[kk] == p_idx, wb_ref[kk], 0.0)
        a_ref[pl.ds(base, _PC), :] = acc                          # written once
        return carry

    jax.lax.fori_loop(0, p_pad // _PC, chunk_body, 0)

    # ---- single MXU contraction: (Cpad, Ppad) @ (Ppad, T) -> (Cpad, T) ----
    res = jnp.dot(pt_ref[...], a_ref[...], preferred_element_type=jnp.float32)
    out_ref[...] = res[:out_ref.shape[0], :]


def softmax_importance_compositor(fragments, zbuf, ptclds,
                                  softmax_scale=1.0, tile_hw=2048):
    """fragments: int (N, K, H, W); zbuf: f32 (N, K, H, W); ptclds: f32 (C, P).
    Returns f32 (N, C, H, W)."""
    n, k, h, w = fragments.shape
    c, p = ptclds.shape
    hw = h * w

    # NCHW-native, lane-dense: only reshapes, no wrapper transposes / pixel pads.
    frag_flat = fragments.reshape(n, k, hw).astype(jnp.int32)
    zbuf_flat = zbuf.reshape(n, k, hw).astype(jnp.float32)

    # Pixel tile: a multiple of 128 lanes, or the full (possibly ragged) extent.
    tile_hw = max(128, (min(tile_hw, hw) // 128) * 128)
    if hw <= tile_hw:
        tile_hw = hw
    grid = (n, pl.cdiv(hw, tile_hw))

    # Pad the tiny (C, P) feature matrix: C to whole sublanes (clean MXU shape),
    # P to the chunk height.  Extra zero columns are never indexed by fragments.
    c_pad = ((c + 7) // 8) * 8
    p_pad = ((p + _PC - 1) // _PC) * _PC
    pt = ptclds.astype(jnp.float32)
    if c_pad != c or p_pad != p:
        pt = jnp.pad(pt, ((0, c_pad - c), (0, p_pad - p)))

    out = pl.pallas_call(
        functools.partial(_compositor_kernel, scale=float(softmax_scale)),
        out_shape=jax.ShapeDtypeStruct((n, c, hw), jnp.float32),
        grid_spec=pltpu.PrefetchScalarGridSpec(
            num_scalar_prefetch=0,
            grid=grid,
            in_specs=[
                pl.BlockSpec((None, k, tile_hw), lambda b, t: (b, 0, t)),   # zbuf
                pl.BlockSpec((None, k, tile_hw), lambda b, t: (b, 0, t)),   # frags
                pl.BlockSpec((c_pad, p_pad), lambda b, t: (0, 0)),          # ptclds
            ],
            out_specs=pl.BlockSpec((None, c, tile_hw), lambda b, t: (b, 0, t)),
            scratch_shapes=[
                pltpu.VMEM((k, _PC, tile_hw), jnp.float32),   # splatted weights
                pltpu.VMEM((k, _PC, tile_hw), jnp.int32),     # splatted indices
                pltpu.VMEM((p_pad, tile_hw), jnp.float32),    # weighted one-hot
            ]),
        compiler_params=pltpu.CompilerParams(
            dimension_semantics=("parallel", "parallel")),
    )(zbuf_flat, frag_flat, pt)

    return out.reshape(n, c, h, w)                               # (N, C, H, W)


def _reference(fragments, zbuf, ptclds, scale=1.0):
    """Pure-JAX transcription of the PyTorch forward for verification."""
    zp = jnp.where(zbuf < 0, -0.0001, zbuf)
    importance = 1.0 / (zp + 1e-6)
    weights = jax.nn.softmax(importance * scale, axis=1)          # (N, K, H, W)
    n, k, h, w = fragments.shape
    gathered = ptclds[:, fragments.reshape(-1)].reshape(
        ptclds.shape[0], n, k, h, w)                              # (C, N, K, H, W)
    images = (weights[None, ...] * gathered).sum(axis=2)          # (C, N, H, W)
    return jnp.transpose(images, (1, 0, 2, 3))                    # (N, C, H, W)


# TODO(synk): background_color path (_add_background_color_to_images) not
# implemented; the default (background_color=None) path is covered.
# TODO(synk): for P >> 128 (thousands of points) the one-hot build scales
# O(TILE*K*P); switch to a DMA/index gather path in that regime.

if __name__ == "__main__":
    key = jax.random.PRNGKey(0)
    k_frag, k_zbuf, k_mask, k_pts = jax.random.split(key, 4)

    N, K, H, W = 2, 8, 16, 16    # batch, points_per_pixel, image_size
    C, P = 4, 128                # feature channels, number of packed points

    fragments = jax.random.randint(k_frag, (N, K, H, W), 0, P, dtype=jnp.int32)
    zbuf = jax.random.uniform(k_zbuf, (N, K, H, W), jnp.float32, 0.1, 5.0)
    # mark ~25% of entries as "no point assigned" (zbuf = -1)
    empty = jax.random.uniform(k_mask, (N, K, H, W)) < 0.25
    zbuf = jnp.where(empty, -1.0, zbuf)
    ptclds = jax.random.normal(k_pts, (C, P), jnp.float32)

    images = softmax_importance_compositor(fragments, zbuf, ptclds,
                                           softmax_scale=1.0)
    images = jax.block_until_ready(images)

    ref = _reference(fragments, zbuf, ptclds, scale=1.0)
    assert images.shape == (N, C, H, W)
    assert jnp.allclose(images, ref, rtol=1e-5, atol=1e-5)

    print("KERNEL_OK")
</pallas_src>

<mosaic_0001>
module attributes {stable_mosaic.version = 11 : i64} {
  func.func @_compositor_kernel(%arg0: i32, %arg1: i32, %arg2: memref<1x8x256xf32, #tpu.memory_space<vmem>>, %arg3: memref<1x8x256xi32, #tpu.memory_space<vmem>>, %arg4: memref<8x128xf32, #tpu.memory_space<vmem>>, %arg5: memref<1x4x256xf32, #tpu.memory_space<vmem>>, %arg6: memref<8x8x256xf32, #tpu.memory_space<vmem>>, %arg7: memref<8x8x256xi32, #tpu.memory_space<vmem>>, %arg8: memref<128x256xf32, #tpu.memory_space<vmem>>) attributes {dimension_semantics = [#tpu.dimension_semantics<parallel>, #tpu.dimension_semantics<parallel>], iteration_bounds = array<i64: 2, 1>, scalar_prefetch = 0 : i64, scratch_operands = 3 : i64, tpu.core_type = #tpu.core_type<tc>, window_params = [{transform_indices = @transform_0, window_bounds = array<i64: 1, 8, 256>}, {transform_indices = @transform_1, window_bounds = array<i64: 1, 8, 256>}, {pipeline_mode = #tpu.pipeline_mode<synchronous>, transform_indices = @transform_2, window_bounds = array<i64: 8, 128>}, {transform_indices = @transform_3, window_bounds = array<i64: 1, 4, 256>}]} {
    %c0 = arith.constant 0 : index
    %c0_0 = arith.constant 0 : index
    %c0_1 = arith.constant 0 : index
    %0 = vector.load %arg2[%c0, %c0_0, %c0_1] : memref<1x8x256xf32, #tpu.memory_space<vmem>>, vector<1x8x256xf32>
    %1 = vector.shape_cast %0 : vector<1x8x256xf32> to vector<8x256xf32>
    %cst = arith.constant 0.000000e+00 : f32
    %2 = vector.broadcast %cst : f32 to vector<8x256xf32>
    %3 = arith.cmpf olt, %1, %2 : vector<8x256xf32>
    %cst_2 = arith.constant -9.99999974E-5 : f32
    %4 = vector.broadcast %cst_2 : f32 to vector<8x256xf32>
    %5 = arith.select %3, %4, %1 : vector<8x256xi1>, vector<8x256xf32>
    %cst_3 = arith.constant 9.99999997E-7 : f32
    %6 = vector.broadcast %cst_3 : f32 to vector<8x256xf32>
    %7 = arith.addf %5, %6 : vector<8x256xf32>
    %cst_4 = arith.constant 1.000000e+00 : f32
    %8 = vector.broadcast %cst_4 : f32 to vector<8x256xf32>
    %9 = arith.divf %8, %7 : vector<8x256xf32>
    %cst_5 = arith.constant 1.000000e+00 : f32
    %10 = vector.broadcast %cst_5 : f32 to vector<8x256xf32>
    %11 = arith.mulf %9, %10 : vector<8x256xf32>
    %cst_6 = arith.constant dense<0xFF800000> : vector<256xf32>
    %12 = vector.multi_reduction <maximumf>, %11, %cst_6 [0] : vector<8x256xf32> to vector<256xf32>
    %13 = vector.shape_cast %12 : vector<256xf32> to vector<1x256xf32>
    %14 = vector.broadcast %13 : vector<1x256xf32> to vector<8x256xf32>
    %15 = arith.subf %11, %14 : vector<8x256xf32>
    %16 = math.exp %15 : vector<8x256xf32>
    %cst_7 = arith.constant dense<0.000000e+00> : vector<256xf32>
    %17 = vector.multi_reduction <add>, %16, %cst_7 [0] : vector<8x256xf32> to vector<256xf32>
    %18 = vector.shape_cast %17 : vector<256xf32> to vector<1x256xf32>
    %19 = tpu.reciprocal %18 : vector<1x256xf32> -> vector<1x256xf32>
    %20 = vector.broadcast %19 : vector<1x256xf32> to vector<8x256xf32>
    %21 = arith.mulf %16, %20 : vector<8x256xf32>
    %c0_8 = arith.constant 0 : index
    %c0_9 = arith.constant 0 : index
    %c0_10 = arith.constant 0 : index
    %22 = vector.load %arg3[%c0_8, %c0_9, %c0_10] : memref<1x8x256xi32, #tpu.memory_space<vmem>>, vector<1x8x256xi32>
    %23 = vector.shape_cast %22 : vector<1x8x256xi32> to vector<8x256xi32>
    %24 = vector.extract_strided_slice %21 {offsets = [0, 0], sizes = [1, 256], strides = [1, 1]} : vector<8x256xf32> to vector<1x256xf32>
    %25 = vector.shape_cast %24 : vector<1x256xf32> to vector<1x256xf32>
    %26 = vector.broadcast %25 : vector<1x256xf32> to vector<8x256xf32>
    %c0_11 = arith.constant 0 : index
    %c0_12 = arith.constant 0 : index
    %c0_13 = arith.constant 0 : index
    %27 = vector.load %arg6[%c0_11, %c0_12, %c0_13] : memref<8x8x256xf32, #tpu.memory_space<vmem>>, vector<1x8x256xf32>
    %28 = vector.shape_cast %27 : vector<1x8x256xf32> to vector<8x256xf32>
    %29 = vector.shape_cast %26 : vector<8x256xf32> to vector<1x8x256xf32>
    tpu.vector_store %arg6[%c0_11, %c0_12, %c0_13], %29 {strides = array<i32>} : memref<8x8x256xf32, #tpu.memory_space<vmem>>, vector<1x8x256xf32>,
    %30 = vector.extract_strided_slice %23 {offsets = [0, 0], sizes = [1, 256], strides = [1, 1]} : vector<8x256xi32> to vector<1x256xi32>
    %31 = vector.shape_cast %30 : vector<1x256xi32> to vector<1x256xi32>
    %32 = vector.broadcast %31 : vector<1x256xi32> to vector<8x256xi32>
    %c0_14 = arith.constant 0 : index
    %c0_15 = arith.constant 0 : index
    %c0_16 = arith.constant 0 : index
    %33 = vector.load %arg7[%c0_14, %c0_15, %c0_16] : memref<8x8x256xi32, #tpu.memory_space<vmem>>, vector<1x8x256xi32>
    %34 = vector.shape_cast %33 : vector<1x8x256xi32> to vector<8x256xi32>
    %35 = vector.shape_cast %32 : vector<8x256xi32> to vector<1x8x256xi32>
    tpu.vector_store %arg7[%c0_14, %c0_15, %c0_16], %35 {strides = array<i32>} : memref<8x8x256xi32, #tpu.memory_space<vmem>>, vector<1x8x256xi32>,
    %36 = vector.extract_strided_slice %21 {offsets = [1, 0], sizes = [1, 256], strides = [1, 1]} : vector<8x256xf32> to vector<1x256xf32>
    %37 = vector.shape_cast %36 : vector<1x256xf32> to vector<1x256xf32>
    %38 = vector.broadcast %37 : vector<1x256xf32> to vector<8x256xf32>
    %c1 = arith.constant 1 : index
    %c0_17 = arith.constant 0 : index
    %c0_18 = arith.constant 0 : index
    %39 = vector.load %arg6[%c1, %c0_17, %c0_18] : memref<8x8x256xf32, #tpu.memory_space<vmem>>, vector<1x8x256xf32>
    %40 = vector.shape_cast %39 : vector<1x8x256xf32> to vector<8x256xf32>
    %41 = vector.shape_cast %38 : vector<8x256xf32> to vector<1x8x256xf32>
    tpu.vector_store %arg6[%c1, %c0_17, %c0_18], %41 {strides = array<i32>} : memref<8x8x256xf32, #tpu.memory_space<vmem>>, vector<1x8x256xf32>,
    %42 = vector.extract_strided_slice %23 {offsets = [1, 0], sizes = [1, 256], strides = [1, 1]} : vector<8x256xi32> to vector<1x256xi32>
    %43 = vector.shape_cast %42 : vector<1x256xi32> to vector<1x256xi32>
    %44 = vector.broadcast %43 : vector<1x256xi32> to vector<8x256xi32>
    %c1_19 = arith.constant 1 : index
    %c0_20 = arith.constant 0 : index
    %c0_21 = arith.constant 0 : index
    %45 = vector.load %arg7[%c1_19, %c0_20, %c0_21] : memref<8x8x256xi32, #tpu.memory_space<vmem>>, vector<1x8x256xi32>
    %46 = vector.shape_cast %45 : vector<1x8x256xi32> to vector<8x256xi32>
    %47 = vector.shape_cast %44 : vector<8x256xi32> to vector<1x8x256xi32>
    tpu.vector_store %arg7[%c1_19, %c0_20, %c0_21], %47 {strides = array<i32>} : memref<8x8x256xi32, #tpu.memory_space<vmem>>, vector<1x8x256xi32>,
    %48 = vector.extract_strided_slice %21 {offsets = [2, 0], sizes = [1, 256], strides = [1, 1]} : vector<8x256xf32> to vector<1x256xf32>
    %49 = vector.shape_cast %48 : vector<1x256xf32> to vector<1x256xf32>
    %50 = vector.broadcast %49 : vector<1x256xf32> to vector<8x256xf32>
    %c2 = arith.constant 2 : index
    %c0_22 = arith.constant 0 : index
    %c0_23 = arith.constant 0 : index
    %51 = vector.load %arg6[%c2, %c0_22, %c0_23] : memref<8x8x256xf32, #tpu.memory_space<vmem>>, vector<1x8x256xf32>
    %52 = vector.shape_cast %51 : vector<1x8x256xf32> to vector<8x256xf32>
    %53 = vector.shape_cast %50 : vector<8x256xf32> to vector<1x8x256xf32>
    tpu.vector_store %arg6[%c2, %c0_22, %c0_23], %53 {strides = array<i32>} : memref<8x8x256xf32, #tpu.memory_space<vmem>>, vector<1x8x256xf32>,
    %54 = vector.extract_strided_slice %23 {offsets = [2, 0], sizes = [1, 256], strides = [1, 1]} : vector<8x256xi32> to vector<1x256xi32>
    %55 = vector.shape_cast %54 : vector<1x256xi32> to vector<1x256xi32>
    %56 = vector.broadcast %55 : vector<1x256xi32> to vector<8x256xi32>
    %c2_24 = arith.constant 2 : index
    %c0_25 = arith.constant 0 : index
    %c0_26 = arith.constant 0 : index
    %57 = vector.load %arg7[%c2_24, %c0_25, %c0_26] : memref<8x8x256xi32, #tpu.memory_space<vmem>>, vector<1x8x256xi32>
    %58 = vector.shape_cast %57 : vector<1x8x256xi32> to vector<8x256xi32>
    %59 = vector.shape_cast %56 : vector<8x256xi32> to vector<1x8x256xi32>
    tpu.vector_store %arg7[%c2_24, %c0_25, %c0_26], %59 {strides = array<i32>} : memref<8x8x256xi32, #tpu.memory_space<vmem>>, vector<1x8x256xi32>,
    %60 = vector.extract_strided_slice %21 {offsets = [3, 0], sizes = [1, 256], strides = [1, 1]} : vector<8x256xf32> to vector<1x256xf32>
    %61 = vector.shape_cast %60 : vector<1x256xf32> to vector<1x256xf32>
    %62 = vector.broadcast %61 : vector<1x256xf32> to vector<8x256xf32>
    %c3 = arith.constant 3 : index
    %c0_27 = arith.constant 0 : index
    %c0_28 = arith.constant 0 : index
    %63 = vector.load %arg6[%c3, %c0_27, %c0_28] : memref<8x8x256xf32, #tpu.memory_space<vmem>>, vector<1x8x256xf32>
    %64 = vector.shape_cast %63 : vector<1x8x256xf32> to vector<8x256xf32>
    %65 = vector.shape_cast %62 : vector<8x256xf32> to vector<1x8x256xf32>
    tpu.vector_store %arg6[%c3, %c0_27, %c0_28], %65 {strides = array<i32>} : memref<8x8x256xf32, #tpu.memory_space<vmem>>, vector<1x8x256xf32>,
    %66 = vector.extract_strided_slice %23 {offsets = [3, 0], sizes = [1, 256], strides = [1, 1]} : vector<8x256xi32> to vector<1x256xi32>
    %67 = vector.shape_cast %66 : vector<1x256xi32> to vector<1x256xi32>
    %68 = vector.broadcast %67 : vector<1x256xi32> to vector<8x256xi32>
    %c3_29 = arith.constant 3 : index
    %c0_30 = arith.constant 0 : index
    %c0_31 = arith.constant 0 : index
    %69 = vector.load %arg7[%c3_29, %c0_30, %c0_31] : memref<8x8x256xi32, #tpu.memory_space<vmem>>, vector<1x8x256xi32>
    %70 = vector.shape_cast %69 : vector<1x8x256xi32> to vector<8x256xi32>
    %71 = vector.shape_cast %68 : vector<8x256xi32> to vector<1x8x256xi32>
    tpu.vector_store %arg7[%c3_29, %c0_30, %c0_31], %71 {strides = array<i32>} : memref<8x8x256xi32, #tpu.memory_space<vmem>>, vector<1x8x256xi32>,
    %72 = vector.extract_strided_slice %21 {offsets = [4, 0], sizes = [1, 256], strides = [1, 1]} : vector<8x256xf32> to vector<1x256xf32>
    %73 = vector.shape_cast %72 : vector<1x256xf32> to vector<1x256xf32>
    %74 = vector.broadcast %73 : vector<1x256xf32> to vector<8x256xf32>
    %c4 = arith.constant 4 : index
    %c0_32 = arith.constant 0 : index
    %c0_33 = arith.constant 0 : index
    %75 = vector.load %arg6[%c4, %c0_32, %c0_33] : memref<8x8x256xf32, #tpu.memory_space<vmem>>, vector<1x8x256xf32>
    %76 = vector.shape_cast %75 : vector<1x8x256xf32> to vector<8x256xf32>
    %77 = vector.shape_cast %74 : vector<8x256xf32> to vector<1x8x256xf32>
    tpu.vector_store %arg6[%c4, %c0_32, %c0_33], %77 {strides = array<i32>} : memref<8x8x256xf32, #tpu.memory_space<vmem>>, vector<1x8x256xf32>,
    %78 = vector.extract_strided_slice %23 {offsets = [4, 0], sizes = [1, 256], strides = [1, 1]} : vector<8x256xi32> to vector<1x256xi32>
    %79 = vector.shape_cast %78 : vector<1x256xi32> to vector<1x256xi32>
    %80 = vector.broadcast %79 : vector<1x256xi32> to vector<8x256xi32>
    %c4_34 = arith.constant 4 : index
    %c0_35 = arith.constant 0 : index
    %c0_36 = arith.constant 0 : index
    %81 = vector.load %arg7[%c4_34, %c0_35, %c0_36] : memref<8x8x256xi32, #tpu.memory_space<vmem>>, vector<1x8x256xi32>
    %82 = vector.shape_cast %81 : vector<1x8x256xi32> to vector<8x256xi32>
    %83 = vector.shape_cast %80 : vector<8x256xi32> to vector<1x8x256xi32>
    tpu.vector_store %arg7[%c4_34, %c0_35, %c0_36], %83 {strides = array<i32>} : memref<8x8x256xi32, #tpu.memory_space<vmem>>, vector<1x8x256xi32>,
    %84 = vector.extract_strided_slice %21 {offsets = [5, 0], sizes = [1, 256], strides = [1, 1]} : vector<8x256xf32> to vector<1x256xf32>
    %85 = vector.shape_cast %84 : vector<1x256xf32> to vector<1x256xf32>
    %86 = vector.broadcast %85 : vector<1x256xf32> to vector<8x256xf32>
    %c5 = arith.constant 5 : index
    %c0_37 = arith.constant 0 : index
    %c0_38 = arith.constant 0 : index
    %87 = vector.load %arg6[%c5, %c0_37, %c0_38] : memref<8x8x256xf32, #tpu.memory_space<vmem>>, vector<1x8x256xf32>
    %88 = vector.shape_cast %87 : vector<1x8x256xf32> to vector<8x256xf32>
    %89 = vector.shape_cast %86 : vector<8x256xf32> to vector<1x8x256xf32>
    tpu.vector_store %arg6[%c5, %c0_37, %c0_38], %89 {strides = array<i32>} : memref<8x8x256xf32, #tpu.memory_space<vmem>>, vector<1x8x256xf32>,
    %90 = vector.extract_strided_slice %23 {offsets = [5, 0], sizes = [1, 256], strides = [1, 1]} : vector<8x256xi32> to vector<1x256xi32>
    %91 = vector.shape_cast %90 : vector<1x256xi32> to vector<1x256xi32>
    %92 = vector.broadcast %91 : vector<1x256xi32> to vector<8x256xi32>
    %c5_39 = arith.constant 5 : index
    %c0_40 = arith.constant 0 : index
    %c0_41 = arith.constant 0 : index
    %93 = vector.load %arg7[%c5_39, %c0_40, %c0_41] : memref<8x8x256xi32, #tpu.memory_space<vmem>>, vector<1x8x256xi32>
    %94 = vector.shape_cast %93 : vector<1x8x256xi32> to vector<8x256xi32>
    %95 = vector.shape_cast %92 : vector<8x256xi32> to vector<1x8x256xi32>
    tpu.vector_store %arg7[%c5_39, %c0_40, %c0_41], %95 {strides = array<i32>} : memref<8x8x256xi32, #tpu.memory_space<vmem>>, vector<1x8x256xi32>,
    %96 = vector.extract_strided_slice %21 {offsets = [6, 0], sizes = [1, 256], strides = [1, 1]} : vector<8x256xf32> to vector<1x256xf32>
    %97 = vector.shape_cast %96 : vector<1x256xf32> to vector<1x256xf32>
    %98 = vector.broadcast %97 : vector<1x256xf32> to vector<8x256xf32>
    %c6 = arith.constant 6 : index
    %c0_42 = arith.constant 0 : index
    %c0_43 = arith.constant 0 : index
    %99 = vector.load %arg6[%c6, %c0_42, %c0_43] : memref<8x8x256xf32, #tpu.memory_space<vmem>>, vector<1x8x256xf32>
    %100 = vector.shape_cast %99 : vector<1x8x256xf32> to vector<8x256xf32>
    %101 = vector.shape_cast %98 : vector<8x256xf32> to vector<1x8x256xf32>
    tpu.vector_store %arg6[%c6, %c0_42, %c0_43], %101 {strides = array<i32>} : memref<8x8x256xf32, #tpu.memory_space<vmem>>, vector<1x8x256xf32>,
    %102 = vector.extract_strided_slice %23 {offsets = [6, 0], sizes = [1, 256], strides = [1, 1]} : vector<8x256xi32> to vector<1x256xi32>
    %103 = vector.shape_cast %102 : vector<1x256xi32> to vector<1x256xi32>
    %104 = vector.broadcast %103 : vector<1x256xi32> to vector<8x256xi32>
    %c6_44 = arith.constant 6 : index
    %c0_45 = arith.constant 0 : index
    %c0_46 = arith.constant 0 : index
    %105 = vector.load %arg7[%c6_44, %c0_45, %c0_46] : memref<8x8x256xi32, #tpu.memory_space<vmem>>, vector<1x8x256xi32>
    %106 = vector.shape_cast %105 : vector<1x8x256xi32> to vector<8x256xi32>
    %107 = vector.shape_cast %104 : vector<8x256xi32> to vector<1x8x256xi32>
    tpu.vector_store %arg7[%c6_44, %c0_45, %c0_46], %107 {strides = array<i32>} : memref<8x8x256xi32, #tpu.memory_space<vmem>>, vector<1x8x256xi32>,
    %108 = vector.extract_strided_slice %21 {offsets = [7, 0], sizes = [1, 256], strides = [1, 1]} : vector<8x256xf32> to vector<1x256xf32>
    %109 = vector.shape_cast %108 : vector<1x256xf32> to vector<1x256xf32>
    %110 = vector.broadcast %109 : vector<1x256xf32> to vector<8x256xf32>
    %c7 = arith.constant 7 : index
    %c0_47 = arith.constant 0 : index
    %c0_48 = arith.constant 0 : index
    %111 = vector.load %arg6[%c7, %c0_47, %c0_48] : memref<8x8x256xf32, #tpu.memory_space<vmem>>, vector<1x8x256xf32>
    %112 = vector.shape_cast %111 : vector<1x8x256xf32> to vector<8x256xf32>
    %113 = vector.shape_cast %110 : vector<8x256xf32> to vector<1x8x256xf32>
    tpu.vector_store %arg6[%c7, %c0_47, %c0_48], %113 {strides = array<i32>} : memref<8x8x256xf32, #tpu.memory_space<vmem>>, vector<1x8x256xf32>,
    %114 = vector.extract_strided_slice %23 {offsets = [7, 0], sizes = [1, 256], strides = [1, 1]} : vector<8x256xi32> to vector<1x256xi32>
    %115 = vector.shape_cast %114 : vector<1x256xi32> to vector<1x256xi32>
    %116 = vector.broadcast %115 : vector<1x256xi32> to vector<8x256xi32>
    %c7_49 = arith.constant 7 : index
    %c0_50 = arith.constant 0 : index
    %c0_51 = arith.constant 0 : index
    %117 = vector.load %arg7[%c7_49, %c0_50, %c0_51] : memref<8x8x256xi32, #tpu.memory_space<vmem>>, vector<1x8x256xi32>
    %118 = vector.shape_cast %117 : vector<1x8x256xi32> to vector<8x256xi32>
    %119 = vector.shape_cast %116 : vector<8x256xi32> to vector<1x8x256xi32>
    tpu.vector_store %arg7[%c7_49, %c0_50, %c0_51], %119 {strides = array<i32>} : memref<8x8x256xi32, #tpu.memory_space<vmem>>, vector<1x8x256xi32>,
    %c0_i32 = arith.constant 0 : i32
    %c16_i32 = arith.constant 16 : i32
    %120 = arith.addi %c0_i32, %c16_i32 : i32
    %c1_i32 = arith.constant 1 : i32
    scf.for %arg9 = %c0_i32 to %120 step %c1_i32  : i32 {
      %c8_i32 = arith.constant 8 : i32
      %128 = arith.muli %arg9, %c8_i32 : i32
      %129 = tpu.assume_multiple %128, 8 : i32
      %130 = tpu.iota {dimensions = array<i32: 0>} : vector<8x256xi32>
      %131 = vector.broadcast %129 : i32 to vector<8x256xi32>
      %132 = arith.addi %130, %131 : vector<8x256xi32>
      %cst_61 = arith.constant 0.000000e+00 : f32
      %133 = vector.broadcast %cst_61 : f32 to vector<8x256xf32>
      %c0_62 = arith.constant 0 : index
      %c0_63 = arith.constant 0 : index
      %c0_64 = arith.constant 0 : index
      %134 = vector.load %arg7[%c0_62, %c0_63, %c0_64] : memref<8x8x256xi32, #tpu.memory_space<vmem>>, vector<1x8x256xi32>
      %135 = vector.shape_cast %134 : vector<1x8x256xi32> to vector<8x256xi32>
      %136 = arith.cmpi eq, %135, %132 : vector<8x256xi32>
      %c0_65 = arith.constant 0 : index
      %c0_66 = arith.constant 0 : index
      %c0_67 = arith.constant 0 : index
      %137 = vector.load %arg6[%c0_65, %c0_66, %c0_67] : memref<8x8x256xf32, #tpu.memory_space<vmem>>, vector<1x8x256xf32>
      %138 = vector.shape_cast %137 : vector<1x8x256xf32> to vector<8x256xf32>
      %cst_68 = arith.constant 0.000000e+00 : f32
      %139 = vector.broadcast %cst_68 : f32 to vector<8x256xf32>
      %140 = arith.select %136, %138, %139 : vector<8x256xi1>, vector<8x256xf32>
      %141 = arith.addf %133, %140 : vector<8x256xf32>
      %c1_69 = arith.constant 1 : index
      %c0_70 = arith.constant 0 : index
      %c0_71 = arith.constant 0 : index
      %142 = vector.load %arg7[%c1_69, %c0_70, %c0_71] : memref<8x8x256xi32, #tpu.memory_space<vmem>>, vector<1x8x256xi32>
      %143 = vector.shape_cast %142 : vector<1x8x256xi32> to vector<8x256xi32>
      %144 = arith.cmpi eq, %143, %132 : vector<8x256xi32>
      %c1_72 = arith.constant 1 : index
      %c0_73 = arith.constant 0 : index
      %c0_74 = arith.constant 0 : index
      %145 = vector.load %arg6[%c1_72, %c0_73, %c0_74] : memref<8x8x256xf32, #tpu.memory_space<vmem>>, vector<1x8x256xf32>
      %146 = vector.shape_cast %145 : vector<1x8x256xf32> to vector<8x256xf32>
      %cst_75 = arith.constant 0.000000e+00 : f32
      %147 = vector.broadcast %cst_75 : f32 to vector<8x256xf32>
      %148 = arith.select %144, %146, %147 : vector<8x256xi1>, vector<8x256xf32>
      %149 = arith.addf %141, %148 : vector<8x256xf32>
      %c2_76 = arith.constant 2 : index
      %c0_77 = arith.constant 0 : index
      %c0_78 = arith.constant 0 : index
      %150 = vector.load %arg7[%c2_76, %c0_77, %c0_78] : memref<8x8x256xi32, #tpu.memory_space<vmem>>, vector<1x8x256xi32>
      %151 = vector.shape_cast %150 : vector<1x8x256xi32> to vector<8x256xi32>
      %152 = arith.cmpi eq, %151, %132 : vector<8x256xi32>
      %c2_79 = arith.constant 2 : index
      %c0_80 = arith.constant 0 : index
      %c0_81 = arith.constant 0 : index
      %153 = vector.load %arg6[%c2_79, %c0_80, %c0_81] : memref<8x8x256xf32, #tpu.memory_space<vmem>>, vector<1x8x256xf32>
      %154 = vector.shape_cast %153 : vector<1x8x256xf32> to vector<8x256xf32>
      %cst_82 = arith.constant 0.000000e+00 : f32
      %155 = vector.broadcast %cst_82 : f32 to vector<8x256xf32>
      %156 = arith.select %152, %154, %155 : vector<8x256xi1>, vector<8x256xf32>
      %157 = arith.addf %149, %156 : vector<8x256xf32>
      %c3_83 = arith.constant 3 : index
      %c0_84 = arith.constant 0 : index
      %c0_85 = arith.constant 0 : index
      %158 = vector.load %arg7[%c3_83, %c0_84, %c0_85] : memref<8x8x256xi32, #tpu.memory_space<vmem>>, vector<1x8x256xi32>
      %159 = vector.shape_cast %158 : vector<1x8x256xi32> to vector<8x256xi32>
      %160 = arith.cmpi eq, %159, %132 : vector<8x256xi32>
      %c3_86 = arith.constant 3 : index
      %c0_87 = arith.constant 0 : index
      %c0_88 = arith.constant 0 : index
      %161 = vector.load %arg6[%c3_86, %c0_87, %c0_88] : memref<8x8x256xf32, #tpu.memory_space<vmem>>, vector<1x8x256xf32>
      %162 = vector.shape_cast %161 : vector<1x8x256xf32> to vector<8x256xf32>
      %cst_89 = arith.constant 0.000000e+00 : f32
      %163 = vector.broadcast %cst_89 : f32 to vector<8x256xf32>
      %164 = arith.select %160, %162, %163 : vector<8x256xi1>, vector<8x256xf32>
      %165 = arith.addf %157, %164 : vector<8x256xf32>
      %c4_90 = arith.constant 4 : index
      %c0_91 = arith.constant 0 : index
      %c0_92 = arith.constant 0 : index
      %166 = vector.load %arg7[%c4_90, %c0_91, %c0_92] : memref<8x8x256xi32, #tpu.memory_space<vmem>>, vector<1x8x256xi32>
      %167 = vector.shape_cast %166 : vector<1x8x256xi32> to vector<8x256xi32>
      %168 = arith.cmpi eq, %167, %132 : vector<8x256xi32>
      %c4_93 = arith.constant 4 : index
      %c0_94 = arith.constant 0 : index
      %c0_95 = arith.constant 0 : index
      %169 = vector.load %arg6[%c4_93, %c0_94, %c0_95] : memref<8x8x256xf32, #tpu.memory_space<vmem>>, vector<1x8x256xf32>
      %170 = vector.shape_cast %169 : vector<1x8x256xf32> to vector<8x256xf32>
      %cst_96 = arith.constant 0.000000e+00 : f32
      %171 = vector.broadcast %cst_96 : f32 to vector<8x256xf32>
      %172 = arith.select %168, %170, %171 : vector<8x256xi1>, vector<8x256xf32>
      %173 = arith.addf %165, %172 : vector<8x256xf32>
      %c5_97 = arith.constant 5 : index
      %c0_98 = arith.constant 0 : index
      %c0_99 = arith.constant 0 : index
      %174 = vector.load %arg7[%c5_97, %c0_98, %c0_99] : memref<8x8x256xi32, #tpu.memory_space<vmem>>, vector<1x8x256xi32>
      %175 = vector.shape_cast %174 : vector<1x8x256xi32> to vector<8x256xi32>
      %176 = arith.cmpi eq, %175, %132 : vector<8x256xi32>
      %c5_100 = arith.constant 5 : index
      %c0_101 = arith.constant 0 : index
      %c0_102 = arith.constant 0 : index
      %177 = vector.load %arg6[%c5_100, %c0_101, %c0_102] : memref<8x8x256xf32, #tpu.memory_space<vmem>>, vector<1x8x256xf32>
      %178 = vector.shape_cast %177 : vector<1x8x256xf32> to vector<8x256xf32>
      %cst_103 = arith.constant 0.000000e+00 : f32
      %179 = vector.broadcast %cst_103 : f32 to vector<8x256xf32>
      %180 = arith.select %176, %178, %179 : vector<8x256xi1>, vector<8x256xf32>
      %181 = arith.addf %173, %180 : vector<8x256xf32>
      %c6_104 = arith.constant 6 : index
      %c0_105 = arith.constant 0 : index
      %c0_106 = arith.constant 0 : index
      %182 = vector.load %arg7[%c6_104, %c0_105, %c0_106] : memref<8x8x256xi32, #tpu.memory_space<vmem>>, vector<1x8x256xi32>
      %183 = vector.shape_cast %182 : vector<1x8x256xi32> to vector<8x256xi32>
      %184 = arith.cmpi eq, %183, %132 : vector<8x256xi32>
      %c6_107 = arith.constant 6 : index
      %c0_108 = arith.constant 0 : index
      %c0_109 = arith.constant 0 : index
      %185 = vector.load %arg6[%c6_107, %c0_108, %c0_109] : memref<8x8x256xf32, #tpu.memory_space<vmem>>, vector<1x8x256xf32>
      %186 = vector.shape_cast %185 : vector<1x8x256xf32> to vector<8x256xf32>
      %cst_110 = arith.constant 0.000000e+00 : f32
      %187 = vector.broadcast %cst_110 : f32 to vector<8x256xf32>
      %188 = arith.select %184, %186, %187 : vector<8x256xi1>, vector<8x256xf32>
      %189 = arith.addf %181, %188 : vector<8x256xf32>
      %c7_111 = arith.constant 7 : index
      %c0_112 = arith.constant 0 : index
      %c0_113 = arith.constant 0 : index
      %190 = vector.load %arg7[%c7_111, %c0_112, %c0_113] : memref<8x8x256xi32, #tpu.memory_space<vmem>>, vector<1x8x256xi32>
      %191 = vector.shape_cast %190 : vector<1x8x256xi32> to vector<8x256xi32>
      %192 = arith.cmpi eq, %191, %132 : vector<8x256xi32>
      %c7_114 = arith.constant 7 : index
      %c0_115 = arith.constant 0 : index
      %c0_116 = arith.constant 0 : index
      %193 = vector.load %arg6[%c7_114, %c0_115, %c0_116] : memref<8x8x256xf32, #tpu.memory_space<vmem>>, vector<1x8x256xf32>
      %194 = vector.shape_cast %193 : vector<1x8x256xf32> to vector<8x256xf32>
      %cst_117 = arith.constant 0.000000e+00 : f32
      %195 = vector.broadcast %cst_117 : f32 to vector<8x256xf32>
      %196 = arith.select %192, %194, %195 : vector<8x256xi1>, vector<8x256xf32>
      %197 = arith.addf %189, %196 : vector<8x256xf32>
      %198 = arith.index_cast %129 : i32 to index
      %c0_118 = arith.constant 0 : index
      %199 = vector.load %arg8[%198, %c0_118] : memref<128x256xf32, #tpu.memory_space<vmem>>, vector<8x256xf32>
      tpu.vector_store %arg8[%198, %c0_118], %197 {strides = array<i32>} : memref<128x256xf32, #tpu.memory_space<vmem>>, vector<8x256xf32>,
    }
    %c16_i32_52 = arith.constant 16 : i32
    %c0_53 = arith.constant 0 : index
    %c0_54 = arith.constant 0 : index
    %121 = vector.load %arg4[%c0_53, %c0_54] : memref<8x128xf32, #tpu.memory_space<vmem>>, vector<8x128xf32>
    %c0_55 = arith.constant 0 : index
    %c0_56 = arith.constant 0 : index
    %122 = vector.load %arg8[%c0_55, %c0_56] : memref<128x256xf32, #tpu.memory_space<vmem>>, vector<128x256xf32>
    %cst_57 = arith.constant dense<0.000000e+00> : vector<8x256xf32>
    %123 = tpu.matmul %121, %122, %cst_57 {dimension_numbers = #tpu.dot_dimension_numbers<[1], [0], [0], [1], [0, 0, 1, 1], [], []>} : vector<8x128xf32>, vector<128x256xf32>, vector<8x256xf32> -> vector<8x256xf32>
    %124 = vector.extract_strided_slice %123 {offsets = [0, 0], sizes = [4, 256], strides = [1, 1]} : vector<8x256xf32> to vector<4x256xf32>
    %c0_58 = arith.constant 0 : index
    %c0_59 = arith.constant 0 : index
    %c0_60 = arith.constant 0 : index
    %125 = vector.load %arg5[%c0_58, %c0_59, %c0_60] : memref<1x4x256xf32, #tpu.memory_space<vmem>>, vector<1x4x256xf32>
    %126 = vector.shape_cast %125 : vector<1x4x256xf32> to vector<4x256xf32>
    %127 = vector.shape_cast %124 : vector<4x256xf32> to vector<1x4x256xf32>
    tpu.vector_store %arg5[%c0_58, %c0_59, %c0_60], %127 {strides = array<i32>} : memref<1x4x256xf32, #tpu.memory_space<vmem>>, vector<1x4x256xf32>,
    return
  }
  func.func @transform_0(%arg0: i32, %arg1: i32) -> (i32, i32, i32) {
    %c0_i32 = arith.constant 0 : i32
    %c0_i32_0 = arith.constant 0 : i32
    return %arg0, %c0_i32, %arg1 : i32, i32, i32
  }
  func.func @transform_1(%arg0: i32, %arg1: i32) -> (i32, i32, i32) {
    %c0_i32 = arith.constant 0 : i32
    %c0_i32_0 = arith.constant 0 : i32
    return %arg0, %c0_i32, %arg1 : i32, i32, i32
  }
  func.func @transform_2(%arg0: i32, %arg1: i32) -> (i32, i32) {
    %c0_i32 = arith.constant 0 : i32
    %c0_i32_0 = arith.constant 0 : i32
    %c0_i32_1 = arith.constant 0 : i32
    return %c0_i32, %c0_i32_0 : i32, i32
  }
  func.func @transform_3(%arg0: i32, %arg1: i32) -> (i32, i32, i32) {
    %c0_i32 = arith.constant 0 : i32
    %c0_i32_0 = arith.constant 0 : i32
    return %arg0, %c0_i32, %arg1 : i32, i32, i32
  }
}

</mosaic_0001>

<llo_original>
// kernel: tpu_custom_call.1
$region0: #{tpu_custom_call.1}
  #allocation0 [shape = 'u32[]', space=smem, size = 0x4, offset = 0x4, fixed_abs, tag = 'smem constant byte address 0x4 - core index']
  #allocation1 [shape = 'u32[144,128]{1,0:T(1,128)}', space=vmem, size = 0x12000, scoped, tag = 'internal scratch']
  #allocation2 [shape = 'f32[8,8,256]{2,1,0:T(8,128)}', space=vmem, size = 0x10000, scoped, tag = 'scratch operand']
  #allocation3 [shape = 's32[8,8,256]{2,1,0:T(8,128)}', space=vmem, size = 0x10000, scoped, tag = 'scratch operand']
  #allocation4 [shape = 'f32[128,256]{1,0:T(8,128)}', space=vmem, size = 0x20000, scoped, tag = 'scratch operand']
  %s0 = inlined_call_operand.hbm [shape: f32[2,8,256], index: 0, kind: input, shape index: {}]
  %s1 = inlined_call_operand.hbm [shape: s32[2,8,256], index: 1, kind: input, shape index: {}]
  %s2 = inlined_call_operand.hbm [shape: f32[8,128], index: 2, kind: input, shape index: {}]
  %s3 = inlined_call_operand.hbm [shape: f32[2,4,256], index: 3, kind: output, shape index: {}]
  %s4 = sld [smem:[#allocation0]]
  $region64: #{tpu_custom_call.1} parent=0
    _
  %s6 = ssub.s32 1, %s4
  %s7 = scalar_select 0, %s6, %s4
  $region1: #{tpu_custom_call.1} parent=0
    #allocation5 [shape = 'u8[16384]{0}', space=vmem, size = 0x4000, scoped, tag = 'input window, operand 0']
    #allocation6 [shape = 's32[2]{0}', space=sflag, size = 0x8, scoped, tag = 'scoped memory for tpu_custom_call.1']
    #allocation7 [shape = 's32[2]{0}', space=sflag, size = 0x8, scoped, tag = 'scoped memory for tpu_custom_call.1']
    #allocation8 [shape = 'u8[16384]{0}', space=vmem, size = 0x4000, scoped, tag = 'input window, operand 1']
    #allocation9 [shape = 's32[2]{0}', space=sflag, size = 0x8, scoped, tag = 'scoped memory for tpu_custom_call.1']
    #allocation10 [shape = 'u8[4096]{0}', space=vmem, size = 0x1000, scoped, tag = 'input window, operand 2, single buffered']
    #allocation11 [shape = 'u8[8192]{0}', space=vmem, size = 0x2000, scoped, tag = 'output window, operand 0']
    %8 = vsyncpa [#allocation6], 0
    %s9 = scalar_lea.sflag [#allocation6], 1
    %10 = vsyncpa %s9, 0
    %11 = vsyncpa [#allocation9], 0
    %s12 = scalar_lea.sflag [#allocation9], 1
    %13 = vsyncpa %s12, 0
    %14 = vsyncpa [#allocation7], 0
    %s15 = scalar_lea.sflag [#allocation7], 1
    %16 = vsyncpa %s15, 0
    loop: start=0, step=1, limit=4
    $region2: #{tpu_custom_call.1} parent=1 // loop_pre_header
      _
    $region3: #{tpu_custom_call.1} parent=1 // loop_header
      %s18 = sphi 0, %s22
      %p19 = scmp.ge.s32.totalorder %s18, 4
      %s25 = sphi 0, %s37
      %s26 = sphi 0, %s33
      %s27 = sphi 0, %s25
      %s28 = sphi 0, %s26
      %s29 = sphi 0, %s27
      %s30 = sphi 0, %s28
      %s42 = sphi 0, %s44
      %s45 = sphi 0, %s42
      %s46 = sphi 0, %s45
      %s62 = sphi 0, %s46
      %s70 = sphi 0, %s72
      %s73 = sphi 0, %s70
      %s74 = sphi 0, %s73
      %s90 = sphi 0, %s74
      %s94 = sphi 0, %s94
      %s96 = sphi 0, %s94
      %s97 = sphi 0, %s96
      %s111 = sphi 0, %s97
      %s119 = sphi 0, %s121
      %s122 = sphi 0, %s119
      %s123 = sphi 0, %s122
      %s139 = sphi 0, %s123
    $region4: #{tpu_custom_call.1} parent=1 // loop_header_branch
      %21 = sbr.rel (%p19) target = $region8
    $region5: #{tpu_custom_call.1} parent=1 // loop_body
      %s23 = ssub.s32 %s18, 1
      %s24 = ssub.s32 %s18, 2
      %s31 = sadd.s32 1, %s26
      %p32 = scmp.ge.s32.totalorder %s31, 1
      %s33 = scalar_select %p32, 0, %s31
      %s34 = sadd.s32 1, %s25
      %s35 = scalar_select %p32, %s34, %s25
      %p36 = scmp.ge.s32.totalorder %s35, 2
      %s37 = scalar_select %p36, 0, %s35
      %s38 = ssub.s32 %s25, %s37
      %s39 = ssub.s32 %s26, %s33
      %s40 = sor.u32 %s38, %s39
      %p41 = scmp.eq.s32.totalorder %s40, 0
      %s43 = sadd.s32 %s42, 1
      %s44 = scalar_select %p41, %s42, %s43
      %p47 = pneg %p41
      %p48 = scmp.eq.s32.totalorder %s18, 1
      %p49 = por %p47, %p48
      %p50 = scmp.ne.s32.totalorder %s42, %s45
      %p51 = scmp.eq.s32.totalorder %s18, 0
      %p52 = por %p50, %p51
      %p53 = scmp.ne.s32.totalorder %s42, %s45
      %p54 = scmp.eq.s32.totalorder %s23, 1
      %p55 = por %p53, %p54
      %p56 = scmp.ne.s32.totalorder %s45, %s46
      %p57 = scmp.eq.s32.totalorder %s23, 0
      %p58 = por %p56, %p57
      %p59 = scmp.ne.s32.totalorder %s45, %s46
      %p60 = scmp.eq.s32.totalorder %s24, 1
      %p61 = por %p59, %p60
      %p63 = scmp.ne.s32.totalorder %s46, %s62
      %p64 = scmp.eq.s32.totalorder %s24, 0
      %p65 = por %p63, %p64
      %s66 = ssub.s32 %s25, %s37
      %s67 = ssub.s32 %s26, %s33
      %s68 = sor.u32 %s66, %s67
      %p69 = scmp.eq.s32.totalorder %s68, 0
      %s71 = sadd.s32 %s70, 1
      %s72 = scalar_select %p69, %s70, %s71
      %p75 = pneg %p69
      %p76 = scmp.eq.s32.totalorder %s18, 1
      %p77 = por %p75, %p76
      %p78 = scmp.ne.s32.totalorder %s70, %s73
      %p79 = scmp.eq.s32.totalorder %s18, 0
      %p80 = por %p78, %p79
      %p81 = scmp.ne.s32.totalorder %s70, %s73
      %p82 = scmp.eq.s32.totalorder %s23, 1
      %p83 = por %p81, %p82
      %p84 = scmp.ne.s32.totalorder %s73, %s74
      %p85 = scmp.eq.s32.totalorder %s23, 0
      %p86 = por %p84, %p85
      %p87 = scmp.ne.s32.totalorder %s73, %s74
      %p88 = scmp.eq.s32.totalorder %s24, 1
      %p89 = por %p87, %p88
      %p91 = scmp.ne.s32.totalorder %s74, %s90
      %p92 = scmp.eq.s32.totalorder %s24, 0
      %p93 = por %p91, %p92
      %s95 = sadd.s32 %s94, 1
      %p98 = scmp.eq.s32.totalorder %s18, 1
      %p99 = scmp.ne.s32.totalorder %s94, %s96
      %p100 = scmp.eq.s32.totalorder %s18, 0
      %p101 = por %p99, %p100
      %p102 = scmp.ne.s32.totalorder %s94, %s96
      %p103 = scmp.eq.s32.totalorder %s23, 1
      %p104 = por %p102, %p103
      %p105 = scmp.ne.s32.totalorder %s96, %s97
      %p106 = scmp.eq.s32.totalorder %s23, 0
      %p107 = por %p105, %p106
      %p108 = scmp.ne.s32.totalorder %s96, %s97
      %p109 = scmp.eq.s32.totalorder %s24, 1
      %p110 = por %p108, %p109
      %p112 = scmp.ne.s32.totalorder %s97, %s111
      %p113 = scmp.eq.s32.totalorder %s24, 0
      %p114 = por %p112, %p113
      %s115 = ssub.s32 %s25, %s37
      %s116 = ssub.s32 %s26, %s33
      %s117 = sor.u32 %s115, %s116
      %p118 = scmp.eq.s32.totalorder %s117, 0
      %s120 = sadd.s32 %s119, 1
      %s121 = scalar_select %p118, %s119, %s120
      %p124 = pneg %p118
      %p125 = scmp.eq.s32.totalorder %s18, 1
      %p126 = por %p124, %p125
      %p127 = scmp.ne.s32.totalorder %s119, %s122
      %p128 = scmp.eq.s32.totalorder %s18, 0
      %p129 = por %p127, %p128
      %p130 = scmp.ne.s32.totalorder %s119, %s122
      %p131 = scmp.eq.s32.totalorder %s23, 1
      %p132 = por %p130, %p131
      %p133 = scmp.ne.s32.totalorder %s122, %s123
      %p134 = scmp.eq.s32.totalorder %s23, 0
      %p135 = por %p133, %p134
      %p136 = scmp.ne.s32.totalorder %s122, %s123
      %p137 = scmp.eq.s32.totalorder %s24, 1
      %p138 = por %p136, %p137
      %p140 = scmp.ne.s32.totalorder %s123, %s139
      %p141 = scmp.eq.s32.totalorder %s24, 0
      %p142 = por %p140, %p141
      %p143 = scmp.le.s32.totalorder 1, %s18
      %p144 = scmp.lt.s32.totalorder %s18, 3
      %p145 = pnand %p143, %p144
      %p146 = pneg %p145
      // Predicated region
      $region9: #{tpu_custom_call.1} parent=5 // pred_check
        _
      $region10: #{tpu_custom_call.1} parent=5 // pred_check_branch
        %148 = sbr.rel (%p145) target = $region12
      $region11: #{tpu_custom_call.1} parent=5 // pred_region
        %s149 = ssub.s32 %s18, 1
        // Predicated region
        $region13: #{tpu_custom_call.1} parent=11 // pred_check
          %p150 = pneg %p107
        $region14: #{tpu_custom_call.1} parent=11 // pred_check_branch
          %152 = sbr.rel (%p150) target = $region16
        $region15: #{tpu_custom_call.1} parent=11 // pred_region
          %s154 = ssub.s32 128, 128
          %155 = vsyncadd [#allocation9], %s154
          %s157 = sshll.u32 [#allocation10], 4
          %s158 = int_to_ptr.vmem [resolvable:$true] %s157
          %160 = dma.hbm_to_vmem [thread:$0]  %s2, 128, %s158, [#allocation9]
        $region16: #{tpu_custom_call.1} parent=11 // pred_fallthru
          _
      $region12: #{tpu_custom_call.1} parent=5 // pred_fallthru
        _
      %p161 = scmp.lt.s32.totalorder %s18, 2
      // Predicated region
      $region17: #{tpu_custom_call.1} parent=5 // pred_check
        %p162 = pneg %p161
      $region18: #{tpu_custom_call.1} parent=5 // pred_check_branch
        %164 = sbr.rel (%p162) target = $region20
      $region19: #{tpu_custom_call.1} parent=5 // pred_region
        // Predicated region
        $region21: #{tpu_custom_call.1} parent=19 // pred_check
          %p165 = pneg %p52
        $region22: #{tpu_custom_call.1} parent=19 // pred_check_branch
          %167 = sbr.rel (%p165) target = $region24
        $region23: #{tpu_custom_call.1} parent=19 // pred_region
          %s168 = sand.u32 %s42, 1
          %s169 = scalar_lea.sflag [#allocation6], %s168
          %s170 = sand.u32 %s42, 1
          %s171 = smul.addr %s170, 16
          %s172 = scalar_lea.vmem [#allocation5], %s171
          %s173 = smul.u32 2, %s26
          %s175 = ssub.s32 256, 256
          %176 = vsyncadd %s169, %s175
          %s177 = smul.addr %s25, 2
          %s178 = sadd.s32 %s173, %s177
          %s179 = smul.addr %s178, 128
          %s180 = scalar_lea.hbm %s0, %s179
          %s182 = sshll.u32 %s172, 4
          %s183 = int_to_ptr.vmem [resolvable:$true] %s182
          %185 = dma.hbm_to_vmem [thread:$0]  %s180, 256, %s183, %s169
        $region24: #{tpu_custom_call.1} parent=19 // pred_fallthru
          _
        // Predicated region
        $region25: #{tpu_custom_call.1} parent=19 // pred_check
          %p186 = pneg %p80
        $region26: #{tpu_custom_call.1} parent=19 // pred_check_branch
          %188 = sbr.rel (%p186) target = $region28
        $region27: #{tpu_custom_call.1} parent=19 // pred_region
          %s189 = sand.u32 %s18, 1
          %s190 = scalar_lea.sflag [#allocation9], %s189
          %s191 = sand.u32 %s70, 1
          %s192 = smul.addr %s191, 16
          %s193 = scalar_lea.vmem [#allocation8], %s192
          %s194 = smul.u32 2, %s26
          %s196 = ssub.s32 256, 256
          %197 = vsyncadd %s190, %s196
          %s198 = smul.addr %s25, 2
          %s199 = sadd.s32 %s194, %s198
          %s200 = smul.addr %s199, 128
          %s201 = scalar_lea.hbm %s1, %s200
          %s203 = sshll.u32 %s193, 4
          %s204 = int_to_ptr.vmem [resolvable:$true] %s203
          %206 = dma.hbm_to_vmem [thread:$0]  %s201, 256, %s204, %s190
        $region28: #{tpu_custom_call.1} parent=19 // pred_fallthru
          _
      $region20: #{tpu_custom_call.1} parent=5 // pred_fallthru
        _
      %p207 = scmp.le.s32.totalorder 1, %s18
      %p208 = scmp.lt.s32.totalorder %s18, 3
      %p209 = pnand %p207, %p208
      %p210 = pneg %p209
      // Predicated region
      $region29: #{tpu_custom_call.1} parent=5 // pred_check
        _
      $region30: #{tpu_custom_call.1} parent=5 // pred_check_branch
        %212 = sbr.rel (%p209) target = $region32
      $region31: #{tpu_custom_call.1} parent=5 // pred_region
        %s213 = ssub.s32 %s18, 1
        %s214 = sand.u32 %s45, 1
        %s215 = scalar_lea.sflag [#allocation6], %s214
        %s216 = sand.u32 %s45, 1
        %s217 = smul.addr %s216, 16
        %s218 = scalar_lea.vmem [#allocation5], %s217
        // Predicated region
        $region33: #{tpu_custom_call.1} parent=31 // pred_check
          %p219 = pneg %p58
        $region34: #{tpu_custom_call.1} parent=31 // pred_check_branch
          %221 = sbr.rel (%p219) target = $region36
        $region35: #{tpu_custom_call.1} parent=31 // pred_region
          %222 = dma.done %s215, 256
        $region36: #{tpu_custom_call.1} parent=31 // pred_fallthru
          _
        %s223 = sand.u32 %s23, 1
        %s224 = scalar_lea.sflag [#allocation9], %s223
        %s225 = sand.u32 %s73, 1
        %s226 = smul.addr %s225, 16
        %s227 = scalar_lea.vmem [#allocation8], %s226
        // Predicated region
        $region37: #{tpu_custom_call.1} parent=31 // pred_check
          %p228 = pneg %p86
        $region38: #{tpu_custom_call.1} parent=31 // pred_check_branch
          %230 = sbr.rel (%p228) target = $region40
        $region39: #{tpu_custom_call.1} parent=31 // pred_region
          %231 = dma.done %s224, 256
        $region40: #{tpu_custom_call.1} parent=31 // pred_fallthru
          _
        // Predicated region
        $region41: #{tpu_custom_call.1} parent=31 // pred_check
          %p232 = pneg %p107
        $region42: #{tpu_custom_call.1} parent=31 // pred_check_branch
          %234 = sbr.rel (%p232) target = $region44
        $region43: #{tpu_custom_call.1} parent=31 // pred_region
          %235 = dma.done [#allocation9], 128
        $region44: #{tpu_custom_call.1} parent=31 // pred_fallthru
          _
        %s236 = sand.u32 %s45, 1
        %s237 = scalar_lea.sflag [#allocation6], %s236
        %s238 = sand.u32 %s45, 1
        %s239 = smul.addr %s238, 16
        %s240 = scalar_lea.vmem [#allocation5], %s239
        %p241 = pneg %p58
        %p242 = pneg %p55
        %s243 = sand.u32 %s23, 1
        %s244 = scalar_lea.sflag [#allocation9], %s243
        %s245 = sand.u32 %s73, 1
        %s246 = smul.addr %s245, 16
        %s247 = scalar_lea.vmem [#allocation8], %s246
        %p248 = pneg %p86
        %p249 = pneg %p83
        %p250 = pneg %p107
        %p251 = pneg %p104
        %p252 = pneg %p135
        %p253 = pneg %p132
        %s254 = sand.u32 %s122, 1
        %s255 = scalar_lea.sflag [#allocation7], %s254
        %s256 = sand.u32 %s122, 1
        %s257 = smul.addr %s256, 8
        %s258 = scalar_lea.vmem [#allocation11], %s257
        %s259 = smul.u32 2, %s28
        %s260 = smul.u32 2, %s28
        %s261 = smul.u32 2, %s28
        %v262 = vld [vmem:[%s218] sm:$0xff]
        %v263 = vld [vmem:[%s218 + $0x8] sm:$0xff]
        %vm264 = vcmp.lt.f32.partialorder %v262, 0.0
        %vm265 = vcmp.lt.f32.partialorder %v263, 0.0
        %v266 = vsel %vm264, -0.0001, %v262
        %v267 = vsel %vm265, -0.0001, %v263
        %v268 = vadd.f32 %v266, 1e-06
        %v269 = vadd.f32 %v267, 1e-06
        %v270 = vrcp.pop %v268
        %v271 = vmul.f32 1.0, %v270
        %v272 = vrcp.pop %v269
        %v273 = vmul.f32 1.0, %v272
        %v274 = vrot.slane %v271, 4
        %v275 = vmax.f32 %v271, %v274
        %v276 = vrot.slane %v275, 2
        %v277 = vmax.f32 %v275, %v276
        %v278 = vrot.slane %v277, 1
        %v279 = vmax.f32 %v277, %v278
        %v280 = vrot.slane %v273, 4
        %v281 = vmax.f32 %v273, %v280
        %v282 = vrot.slane %v281, 2
        %v283 = vmax.f32 %v281, %v282
        %v284 = vrot.slane %v283, 1
        %v285 = vmax.f32 %v283, %v284
        %v286 = vsub.f32 %v271, %v279
        %v287 = vsub.f32 %v273, %v285
        %v288 = vmul.f32 %v286, 1.442695
        %v289 = vpow.pop %v288
        %v290 = vmul.f32 %v287, 1.442695
        %v291 = vpow.pop %v290
        %v292 = vrot.slane %v289, 4
        %v293 = vadd.f32 %v289, %v292
        %v294 = vrot.slane %v293, 2
        %v295 = vadd.f32 %v293, %v294
        %v296 = vrot.slane %v295, 1
        %v297 = vadd.f32 %v295, %v296
        %v298 = vrot.slane %v291, 4
        %v299 = vadd.f32 %v291, %v298
        %v300 = vrot.slane %v299, 2
        %v301 = vadd.f32 %v299, %v300
        %v302 = vrot.slane %v301, 1
        %v303 = vadd.f32 %v301, %v302
        %v304 = vrcp.pop %v297
        %v305 = vrcp.pop %v303
        %v306 = vmul.f32 %v289, %v304
        %v307 = vmul.f32 %v291, %v305
        %v308 = vld [vmem:[%s227] sm:$0xff]
        %v309 = vld [vmem:[%s227 + $0x8] sm:$0xff]
        %v310 = vlaneseq
        %v311 = vshrl.u32 %v310, 7
        %v312 = vsub.s32 0, %v311
        %v313 = vrot.slane %v306, %v312
        %v314 = vlaneseq
        %v315 = vshrl.u32 %v314, 7
        %v316 = vsub.s32 0, %v315
        %v317 = vrot.slane %v307, %v316
        %318 = vst [vmem:[#allocation2] sm:$0xff] %v313
        %319 = vst [vmem:[#allocation2 + $0x8] sm:$0xff] %v317
        %v320 = vlaneseq
        %v321 = vshrl.u32 %v320, 7
        %v322 = vsub.s32 0, %v321
        %v323 = vrot.slane %v308, %v322
        %v324 = vlaneseq
        %v325 = vshrl.u32 %v324, 7
        %v326 = vsub.s32 0, %v325
        %v327 = vrot.slane %v309, %v326
        %328 = vst [vmem:[#allocation3] sm:$0xff] %v323
        %329 = vst [vmem:[#allocation3 + $0x8] sm:$0xff] %v327
        %v330 = vlaneseq
        %v331 = vshrl.u32 %v330, 7
        %v332 = vsub.s32 1, %v331
        %v333 = vrot.slane %v306, %v332
        %v334 = vlaneseq
        %v335 = vshrl.u32 %v334, 7
        %v336 = vsub.s32 1, %v335
        %v337 = vrot.slane %v307, %v336
        %s338 = scalar_lea.vmem [#allocation2], 16
        %339 = vst [vmem:[%s338] sm:$0xff] %v333
        %340 = vst [vmem:[%s338 + $0x8] sm:$0xff] %v337
        %v341 = vlaneseq
        %v342 = vshrl.u32 %v341, 7
        %v343 = vsub.s32 1, %v342
        %v344 = vrot.slane %v308, %v343
        %v345 = vlaneseq
        %v346 = vshrl.u32 %v345, 7
        %v347 = vsub.s32 1, %v346
        %v348 = vrot.slane %v309, %v347
        %s349 = scalar_lea.vmem [#allocation3], 16
        %350 = vst [vmem:[%s349] sm:$0xff] %v344
        %351 = vst [vmem:[%s349 + $0x8] sm:$0xff] %v348
        %v352 = vlaneseq
        %v353 = vshrl.u32 %v352, 7
        %v354 = vsub.s32 2, %v353
        %v355 = vrot.slane %v306, %v354
        %v356 = vlaneseq
        %v357 = vshrl.u32 %v356, 7
        %v358 = vsub.s32 2, %v357
        %v359 = vrot.slane %v307, %v358
        %s360 = scalar_lea.vmem [#allocation2], 32
        %361 = vst [vmem:[%s360] sm:$0xff] %v355
        %362 = vst [vmem:[%s360 + $0x8] sm:$0xff] %v359
        %v363 = vlaneseq
        %v364 = vshrl.u32 %v363, 7
        %v365 = vsub.s32 2, %v364
        %v366 = vrot.slane %v308, %v365
        %v367 = vlaneseq
        %v368 = vshrl.u32 %v367, 7
        %v369 = vsub.s32 2, %v368
        %v370 = vrot.slane %v309, %v369
        %s371 = scalar_lea.vmem [#allocation3], 32
        %372 = vst [vmem:[%s371] sm:$0xff] %v366
        %373 = vst [vmem:[%s371 + $0x8] sm:$0xff] %v370
        %v374 = vlaneseq
        %v375 = vshrl.u32 %v374, 7
        %v376 = vsub.s32 3, %v375
        %v377 = vrot.slane %v306, %v376
        %v378 = vlaneseq
        %v379 = vshrl.u32 %v378, 7
        %v380 = vsub.s32 3, %v379
        %v381 = vrot.slane %v307, %v380
        %s382 = scalar_lea.vmem [#allocation2], 48
        %383 = vst [vmem:[%s382] sm:$0xff] %v377
        %384 = vst [vmem:[%s382 + $0x8] sm:$0xff] %v381
        %v385 = vlaneseq
        %v386 = vshrl.u32 %v385, 7
        %v387 = vsub.s32 3, %v386
        %v388 = vrot.slane %v308, %v387
        %v389 = vlaneseq
        %v390 = vshrl.u32 %v389, 7
        %v391 = vsub.s32 3, %v390
        %v392 = vrot.slane %v309, %v391
        %s393 = scalar_lea.vmem [#allocation3], 48
        %394 = vst [vmem:[%s393] sm:$0xff] %v388
        %395 = vst [vmem:[%s393 + $0x8] sm:$0xff] %v392
        %v396 = vlaneseq
        %v397 = vshrl.u32 %v396, 7
        %v398 = vsub.s32 4, %v397
        %v399 = vrot.slane %v306, %v398
        %v400 = vlaneseq
        %v401 = vshrl.u32 %v400, 7
        %v402 = vsub.s32 4, %v401
        %v403 = vrot.slane %v307, %v402
        %s404 = scalar_lea.vmem [#allocation2], 64
        %405 = vst [vmem:[%s404] sm:$0xff] %v399
        %406 = vst [vmem:[%s404 + $0x8] sm:$0xff] %v403
        %v407 = vlaneseq
        %v408 = vshrl.u32 %v407, 7
        %v409 = vsub.s32 4, %v408
        %v410 = vrot.slane %v308, %v409
        %v411 = vlaneseq
        %v412 = vshrl.u32 %v411, 7
        %v413 = vsub.s32 4, %v412
        %v414 = vrot.slane %v309, %v413
        %s415 = scalar_lea.vmem [#allocation3], 64
        %416 = vst [vmem:[%s415] sm:$0xff] %v410
        %417 = vst [vmem:[%s415 + $0x8] sm:$0xff] %v414
        %v418 = vlaneseq
        %v419 = vshrl.u32 %v418, 7
        %v420 = vsub.s32 5, %v419
        %v421 = vrot.slane %v306, %v420
        %v422 = vlaneseq
        %v423 = vshrl.u32 %v422, 7
        %v424 = vsub.s32 5, %v423
        %v425 = vrot.slane %v307, %v424
        %s426 = scalar_lea.vmem [#allocation2], 80
        %427 = vst [vmem:[%s426] sm:$0xff] %v421
        %428 = vst [vmem:[%s426 + $0x8] sm:$0xff] %v425
        %v429 = vlaneseq
        %v430 = vshrl.u32 %v429, 7
        %v431 = vsub.s32 5, %v430
        %v432 = vrot.slane %v308, %v431
        %v433 = vlaneseq
        %v434 = vshrl.u32 %v433, 7
        %v435 = vsub.s32 5, %v434
        %v436 = vrot.slane %v309, %v435
        %s437 = scalar_lea.vmem [#allocation3], 80
        %438 = vst [vmem:[%s437] sm:$0xff] %v432
        %439 = vst [vmem:[%s437 + $0x8] sm:$0xff] %v436
        %v440 = vlaneseq
        %v441 = vshrl.u32 %v440, 7
        %v442 = vsub.s32 6, %v441
        %v443 = vrot.slane %v306, %v442
        %v444 = vlaneseq
        %v445 = vshrl.u32 %v444, 7
        %v446 = vsub.s32 6, %v445
        %v447 = vrot.slane %v307, %v446
        %s448 = scalar_lea.vmem [#allocation2], 96
        %449 = vst [vmem:[%s448] sm:$0xff] %v443
        %450 = vst [vmem:[%s448 + $0x8] sm:$0xff] %v447
        %v451 = vlaneseq
        %v452 = vshrl.u32 %v451, 7
        %v453 = vsub.s32 6, %v452
        %v454 = vrot.slane %v308, %v453
        %v455 = vlaneseq
        %v456 = vshrl.u32 %v455, 7
        %v457 = vsub.s32 6, %v456
        %v458 = vrot.slane %v309, %v457
        %s459 = scalar_lea.vmem [#allocation3], 96
        %460 = vst [vmem:[%s459] sm:$0xff] %v454
        %461 = vst [vmem:[%s459 + $0x8] sm:$0xff] %v458
        %v462 = vlaneseq
        %v463 = vshrl.u32 %v462, 7
        %v464 = vsub.s32 7, %v463
        %v465 = vrot.slane %v306, %v464
        %v466 = vlaneseq
        %v467 = vshrl.u32 %v466, 7
        %v468 = vsub.s32 7, %v467
        %v469 = vrot.slane %v307, %v468
        %s470 = scalar_lea.vmem [#allocation2], 112
        %471 = vst [vmem:[%s470] sm:$0xff] %v465
        %472 = vst [vmem:[%s470 + $0x8] sm:$0xff] %v469
        %v473 = vlaneseq
        %v474 = vshrl.u32 %v473, 7
        %v475 = vsub.s32 7, %v474
        %v476 = vrot.slane %v308, %v475
        %v477 = vlaneseq
        %v478 = vshrl.u32 %v477, 7
        %v479 = vsub.s32 7, %v478
        %v480 = vrot.slane %v309, %v479
        %s481 = scalar_lea.vmem [#allocation3], 112
        %482 = vst [vmem:[%s481] sm:$0xff] %v476
        %483 = vst [vmem:[%s481 + $0x8] sm:$0xff] %v480
        loop: start=0, step=1, limit=16
        $region45: #{tpu_custom_call.1} parent=31 // loop_pre_header
          _
        $region46: #{tpu_custom_call.1} parent=31 // loop_header
          %s485 = sphi 0, %s489
          %p486 = scmp.ge.s32.totalorder %s485, 16
        $region47: #{tpu_custom_call.1} parent=31 // loop_header_branch
          %488 = sbr.rel (%p486) target = $region51
        $region48: #{tpu_custom_call.1} parent=31 // loop_body
          %s490 = smul.u32 %s485, 8
          %v491 = vlaneseq
          %v492 = vshrl.u32 %v491, 7
          %v493 = vstv %s490
          %v494 = vadd.s32 %v492, %v493
          %v495 = vld [vmem:[#allocation3] sm:$0xff]
          %v496 = vld [vmem:[#allocation3 + $0x8] sm:$0xff]
          %vm497 = vcmp.eq.s32.totalorder %v495, %v494
          %vm498 = vcmp.eq.s32.totalorder %v496, %v494
          %v499 = vld [vmem:[#allocation2] sm:$0xff]
          %v500 = vld [vmem:[#allocation2 + $0x8] sm:$0xff]
          %v501 = vsel %vm497, %v499, 0.0
          %v502 = vsel %vm498, %v500, 0.0
          %v503 = vadd.f32 %v501, 0.0
          %v504 = vadd.f32 %v502, 0.0
          %v505 = vld [vmem:[%s349] sm:$0xff]
          %v506 = vld [vmem:[%s349 + $0x8] sm:$0xff]
          %vm507 = vcmp.eq.s32.totalorder %v505, %v494
          %vm508 = vcmp.eq.s32.totalorder %v506, %v494
          %v509 = vld [vmem:[%s338] sm:$0xff]
          %v510 = vld [vmem:[%s338 + $0x8] sm:$0xff]
          %v511 = vsel %vm507, %v509, 0.0
          %v512 = vsel %vm508, %v510, 0.0
          %v513 = vadd.f32 %v503, %v511
          %v514 = vadd.f32 %v504, %v512
          %v515 = vld [vmem:[%s371] sm:$0xff]
          %v516 = vld [vmem:[%s371 + $0x8] sm:$0xff]
          %vm517 = vcmp.eq.s32.totalorder %v515, %v494
          %vm518 = vcmp.eq.s32.totalorder %v516, %v494
          %v519 = vld [vmem:[%s360] sm:$0xff]
          %v520 = vld [vmem:[%s360 + $0x8] sm:$0xff]
          %v521 = vsel %vm517, %v519, 0.0
          %v522 = vsel %vm518, %v520, 0.0
          %v523 = vadd.f32 %v513, %v521
          %v524 = vadd.f32 %v514, %v522
          %v525 = vld [vmem:[%s393] sm:$0xff]
          %v526 = vld [vmem:[%s393 + $0x8] sm:$0xff]
          %vm527 = vcmp.eq.s32.totalorder %v525, %v494
          %vm528 = vcmp.eq.s32.totalorder %v526, %v494
          %v529 = vld [vmem:[%s382] sm:$0xff]
          %v530 = vld [vmem:[%s382 + $0x8] sm:$0xff]
          %v531 = vsel %vm527, %v529, 0.0
          %v532 = vsel %vm528, %v530, 0.0
          %v533 = vadd.f32 %v523, %v531
          %v534 = vadd.f32 %v524, %v532
          %v535 = vld [vmem:[%s415] sm:$0xff]
          %v536 = vld [vmem:[%s415 + $0x8] sm:$0xff]
          %vm537 = vcmp.eq.s32.totalorder %v535, %v494
          %vm538 = vcmp.eq.s32.totalorder %v536, %v494
          %v539 = vld [vmem:[%s404] sm:$0xff]
          %v540 = vld [vmem:[%s404 + $0x8] sm:$0xff]
          %v541 = vsel %vm537, %v539, 0.0
          %v542 = vsel %vm538, %v540, 0.0
          %v543 = vadd.f32 %v533, %v541
          %v544 = vadd.f32 %v534, %v542
          %v545 = vld [vmem:[%s437] sm:$0xff]
          %v546 = vld [vmem:[%s437 + $0x8] sm:$0xff]
          %vm547 = vcmp.eq.s32.totalorder %v545, %v494
          %vm548 = vcmp.eq.s32.totalorder %v546, %v494
          %v549 = vld [vmem:[%s426] sm:$0xff]
          %v550 = vld [vmem:[%s426 + $0x8] sm:$0xff]
          %v551 = vsel %vm547, %v549, 0.0
          %v552 = vsel %vm548, %v550, 0.0
          %v553 = vadd.f32 %v543, %v551
          %v554 = vadd.f32 %v544, %v552
          %v555 = vld [vmem:[%s459] sm:$0xff]
          %v556 = vld [vmem:[%s459 + $0x8] sm:$0xff]
          %vm557 = vcmp.eq.s32.totalorder %v555, %v494
          %vm558 = vcmp.eq.s32.totalorder %v556, %v494
          %v559 = vld [vmem:[%s448] sm:$0xff]
          %v560 = vld [vmem:[%s448 + $0x8] sm:$0xff]
          %v561 = vsel %vm557, %v559, 0.0
          %v562 = vsel %vm558, %v560, 0.0
          %v563 = vadd.f32 %v553, %v561
          %v564 = vadd.f32 %v554, %v562
          %v565 = vld [vmem:[%s481] sm:$0xff]
          %v566 = vld [vmem:[%s481 + $0x8] sm:$0xff]
          %vm567 = vcmp.eq.s32.totalorder %v565, %v494
          %vm568 = vcmp.eq.s32.totalorder %v566, %v494
          %v569 = vld [vmem:[%s470] sm:$0xff]
          %v570 = vld [vmem:[%s470 + $0x8] sm:$0xff]
          %v571 = vsel %vm567, %v569, 0.0
          %v572 = vsel %vm568, %v570, 0.0
          %v573 = vadd.f32 %v563, %v571
          %v574 = vadd.f32 %v564, %v572
          %s575 = sshra.s32 %s490, 3
          %s576 = sand.u32 %s490, 7
          %s577 = smul.u32 %s575, 2
          %s578 = smul.addr %s577, 8
          %s579 = scalar_lea.vmem [#allocation4], %s578
          %580 = vst [vmem:[%s579] sm:$0xff] %v573
          %581 = vst [vmem:[%s579 + $0x8] sm:$0xff] %v574
        $region49: #{tpu_custom_call.1} parent=31 // loop_footer
          %s489 = sadd.s32 1, %s485
        $region50: #{tpu_custom_call.1} parent=31 // loop_footer_branch
          %484 = sbr.rel target = $region46
        $region51: #{tpu_custom_call.1} parent=31 // loop_exit
          _
        %v582 = vld [vmem:[#allocation10] sm:$0xff]
        %v583 = vld [vmem:[#allocation4] sm:$0xff]
        %v584 = vld [vmem:[#allocation4 + $0x8] sm:$0xff]
        %v585 = vld [vmem:[#allocation4 + $0x10] sm:$0xff]
        %v586 = vld [vmem:[#allocation4 + $0x18] sm:$0xff]
        %v587 = vld [vmem:[#allocation4 + $0x20] sm:$0xff]
        %v588 = vld [vmem:[#allocation4 + $0x28] sm:$0xff]
        %v589 = vld [vmem:[#allocation4 + $0x30] sm:$0xff]
        %v590 = vld [vmem:[#allocation4 + $0x38] sm:$0xff]
        %v591 = vld [vmem:[#allocation4 + $0x40] sm:$0xff]
        %v592 = vld [vmem:[#allocation4 + $0x48] sm:$0xff]
        %v593 = vld [vmem:[#allocation4 + $0x50] sm:$0xff]
        %v594 = vld [vmem:[#allocation4 + $0x58] sm:$0xff]
        %v595 = vld [vmem:[#allocation4 + $0x60] sm:$0xff]
        %v596 = vld [vmem:[#allocation4 + $0x68] sm:$0xff]
        %v597 = vld [vmem:[#allocation4 + $0x70] sm:$0xff]
        %v598 = vld [vmem:[#allocation4 + $0x78] sm:$0xff]
        %v599 = vld [vmem:[#allocation4 + $0x80] sm:$0xff]
        %v600 = vld [vmem:[#allocation4 + $0x88] sm:$0xff]
        %v601 = vld [vmem:[#allocation4 + $0x90] sm:$0xff]
        %v602 = vld [vmem:[#allocation4 + $0x98] sm:$0xff]
        %v603 = vld [vmem:[#allocation4 + $0xa0] sm:$0xff]
        %v604 = vld [vmem:[#allocation4 + $0xa8] sm:$0xff]
        %v605 = vld [vmem:[#allocation4 + $0xb0] sm:$0xff]
        %v606 = vld [vmem:[#allocation4 + $0xb8] sm:$0xff]
        %v607 = vld [vmem:[#allocation4 + $0xc0] sm:$0xff]
        %v608 = vld [vmem:[#allocation4 + $0xc8] sm:$0xff]
        %v609 = vld [vmem:[#allocation4 + $0xd0] sm:$0xff]
        %v610 = vld [vmem:[#allocation4 + $0xd8] sm:$0xff]
        %v611 = vld [vmem:[#allocation4 + $0xe0] sm:$0xff]
        %v612 = vld [vmem:[#allocation4 + $0xe8] sm:$0xff]
        %v613 = vld [vmem:[#allocation4 + $0xf0] sm:$0xff]
        %v614 = vld [vmem:[#allocation4 + $0xf8] sm:$0xff]
        %615 = vmatprep.subr.mxu0 %v584
        %616 = vmatpush1.msra.mxu0 %v583
        %617 = vmatprep.subr.mxu0 %v586
        %618 = vmatpush1.msra.mxu0 %v585
        %619 = vmatprep.subr.mxu0 %v588
        %620 = vmatpush1.msra.mxu0 %v587
        %621 = vmatprep.subr.mxu0 %v590
        %622 = vmatpush1.msra.mxu0 %v589
        %623 = vmatprep.subr.mxu0 %v592
        %624 = vmatpush1.msra.mxu0 %v591
        %625 = vmatprep.subr.mxu0 %v594
        %626 = vmatpush1.msra.mxu0 %v593
        %627 = vmatprep.subr.mxu0 %v596
        %628 = vmatpush1.msra.mxu0 %v595
        %629 = vmatprep.subr.mxu0 %v598
        %630 = vmatpush1.msra.mxu0 %v597
        %631 = vmatprep.subr.mxu0 %v600
        %632 = vmatpush1.msra.mxu0 %v599
        %633 = vmatprep.subr.mxu0 %v602
        %634 = vmatpush1.msra.mxu0 %v601
        %635 = vmatprep.subr.mxu0 %v604
        %636 = vmatpush1.msra.mxu0 %v603
        %637 = vmatprep.subr.mxu0 %v606
        %638 = vmatpush1.msra.mxu0 %v605
        %639 = vmatprep.subr.mxu0 %v608
        %640 = vmatpush1.msra.mxu0 %v607
        %641 = vmatprep.subr.mxu0 %v610
        %642 = vmatpush1.msra.mxu0 %v609
        %643 = vmatprep.subr.mxu0 %v612
        %644 = vmatpush1.msra.mxu0 %v611
        %645 = vmatprep.subr.mxu0 %v614
        %646 = vmatpush1.msra.mxu0 %v613
        %647 = vmatprep.subr.mxu0 0.0
        %648 = vmatpush1.msra.mxu0 0.0
        %649 = vmatprep.subr.mxu0 0.0
        %650 = vmatpush1.msra.mxu0 0.0
        %651 = vmatprep.subr.mxu0 0.0
        %652 = vmatpush1.msra.mxu0 0.0
        %653 = vmatprep.subr.mxu0 0.0
        %654 = vmatpush1.msra.mxu0 0.0
        %655 = vmatprep.subr.mxu0 0.0
        %656 = vmatpush1.msra.mxu0 0.0
        %657 = vmatprep.subr.mxu0 0.0
        %658 = vmatpush1.msra.mxu0 0.0
        %659 = vmatprep.subr.mxu0 0.0
        %660 = vmatpush1.msra.mxu0 0.0
        %661 = vmatprep.subr.mxu0 0.0
        %662 = vmatpush1.msra.mxu0 0.0
        %663 = vmatprep.subr.mxu0 0.0
        %664 = vmatpush1.msra.mxu0 0.0
        %665 = vmatprep.subr.mxu0 0.0
        %666 = vmatpush1.msra.mxu0 0.0
        %667 = vmatprep.subr.mxu0 0.0
        %668 = vmatpush1.msra.mxu0 0.0
        %669 = vmatprep.subr.mxu0 0.0
        %670 = vmatpush1.msra.mxu0 0.0
        %671 = vmatprep.subr.mxu0 0.0
        %672 = vmatpush1.msra.mxu0 0.0
        %673 = vmatprep.subr.mxu0 0.0
        %674 = vmatpush1.msra.mxu0 0.0
        %675 = vmatprep.subr.mxu0 0.0
        %676 = vmatpush1.msra.mxu0 0.0
        %677 = vmatprep.subr.mxu0 0.0
        %678 = vmatpush1.msra.mxu0 0.0
        %679 = vmatprep.mubr.f32.mxu0 0.0
        %680 = vmatmul.mubr.f32.gmra.mrb[0].mxu0 %v582
        %v681 = vpop.f32.mrb[0].mxu0
        %v682 = vadd.f32 0.0, %v681
        %v683 = vpop.f32.mrb[0].mxu0
        %v684 = vadd.f32 0.0, %v683
        %685 = vdwg.mxu0
        %v688 = vcombine.low %v682, %v684
        %690 = vst [vmem:[%s258] sm:$0xff] %v688
        %s691 = sand.u32 %s122, 1
        %s692 = scalar_lea.sflag [#allocation7], %s691
        %s693 = sand.u32 %s122, 1
        %s694 = smul.addr %s693, 8
        %s695 = scalar_lea.vmem [#allocation11], %s694
        // Predicated region
        $region52: #{tpu_custom_call.1} parent=31 // pred_check
          %p696 = pneg %p132
        $region53: #{tpu_custom_call.1} parent=31 // pred_check_branch
          %698 = sbr.rel (%p696) target = $region55
        $region54: #{tpu_custom_call.1} parent=31 // pred_region
          %s699 = smul.u32 2, %s28
          %s701 = ssub.s32 128, 128
          %702 = vsyncadd %s692, %s701
          %s703 = smul.addr %s27, 2
          %s704 = sadd.s32 %s699, %s703
          %s705 = smul.addr %s704, 64
          %s706 = scalar_lea.hbm %s3, %s705
          %s708 = sshll.u32 %s695, 4
          %s709 = int_to_ptr.vmem [resolvable:$true] %s708
          %711 = dma.vmem_to_hbm [thread:$0]  %s709, 128, %s706, %s692
        $region55: #{tpu_custom_call.1} parent=31 // pred_fallthru
          _
      $region32: #{tpu_custom_call.1} parent=5 // pred_fallthru
        _
      %p712 = scmp.le.s32.totalorder 2, %s18
      // Predicated region
      $region56: #{tpu_custom_call.1} parent=5 // pred_check
        %p713 = pneg %p712
      $region57: #{tpu_custom_call.1} parent=5 // pred_check_branch
        %715 = sbr.rel (%p713) target = $region59
      $region58: #{tpu_custom_call.1} parent=5 // pred_region
        %s716 = ssub.s32 %s18, 2
        // Predicated region
        $region60: #{tpu_custom_call.1} parent=58 // pred_check
          %p717 = pneg %p138
        $region61: #{tpu_custom_call.1} parent=58 // pred_check_branch
          %719 = sbr.rel (%p717) target = $region63
        $region62: #{tpu_custom_call.1} parent=58 // pred_region
          %s720 = sand.u32 %s123, 1
          %s721 = scalar_lea.sflag [#allocation7], %s720
          %s722 = sand.u32 %s123, 1
          %s723 = smul.addr %s722, 8
          %s724 = scalar_lea.vmem [#allocation11], %s723
          %725 = dma.done %s721, 128
        $region63: #{tpu_custom_call.1} parent=58 // pred_fallthru
          _
      $region59: #{tpu_custom_call.1} parent=5 // pred_fallthru
        _
    $region6: #{tpu_custom_call.1} parent=1 // loop_footer
      %s22 = sadd.s32 1, %s18
    $region7: #{tpu_custom_call.1} parent=1 // loop_footer_branch
      %17 = sbr.rel target = $region3
    $region8: #{tpu_custom_call.1} parent=1 // loop_exit
      _
    %726 = vsyncpa [#allocation6], 1
    %s727 = scalar_lea.sflag [#allocation6], 1
    %728 = vsyncpa %s727, 1
    %729 = vsyncpa [#allocation9], 1
    %s730 = scalar_lea.sflag [#allocation9], 1
    %731 = vsyncpa %s730, 1
    %732 = vsyncpa [#allocation7], 1
    %s733 = scalar_lea.sflag [#allocation7], 1
    %734 = vsyncpa %s733, 1

</llo_original>
